<compile_context>
chip_gen: v6e
topology: v6e:2x2x1
jax: 0.10.0
libtpu: 0.0.40
codegen_flags: <defaults>
</compile_context>

<pallas_src>
import functools

import jax
import jax.numpy as jnp
from jax import lax
from jax.experimental import pallas as pl
from jax.experimental.pallas import tpu as pltpu


def _att_kernel(h_ref, proj_ref, w1_ref, u_ref, msk_ref, r_ref, out_ref,
                m_sc, l_sc, acc_sc, *, tile_nf, nf_valid, ragged):
    """One (batch, sequence-tile) grid step in the folded (lane-packed) layout.

    h_ref is (TNf, G*D): G original sequence rows per kernel row. The packed
    weights (block-diagonal) make every matmul / tanh / exp lane-dense.
    """
    k = pl.program_id(1)                       # sequence-tile index (reduction)

    # ---- per-batch init: first sequence tile only ----------------------------
    @pl.when(k == 0)
    def _init():
        m_sc[...] = jnp.full_like(m_sc, -jnp.inf)
        l_sc[...] = jnp.zeros_like(l_sc)
        acc_sc[...] = jnp.zeros_like(acc_sc)

    hf = h_ref[...].astype(jnp.float32)        # (TNf, G*D); bf16 h upcast here

    if ragged:
        # Last tile may read past the end of the folded sequence: zero those
        # rows so garbage can never reach the accumulators (0 * NaN == NaN).
        row = k * tile_nf + lax.broadcasted_iota(jnp.int32, (tile_nf, 1), 0)
        valid = row < nf_valid                 # (TNf, 1)
        hf = jnp.where(valid, hf, 0.0)

    # m = tanh([h ; att] @ W^T + b) == tanh(h @ W1^T + (att @ W2^T + b)),
    # computed per lane group with the block-diagonal W1.            (TNf, G*O)
    m = jnp.tanh(
        jnp.dot(hf, w1_ref[...], preferred_element_type=jnp.float32)
        + proj_ref[...])

    # beta = m @ u (block-diagonal u): one logit per original sequence row,
    # done on the otherwise idle MXU.                                 (TNf, G)
    beta = jnp.dot(m, u_ref[...], preferred_element_type=jnp.float32)

    if ragged:
        beta = jnp.where(valid, beta, -jnp.inf)   # padded rows get zero weight

    # ---- online softmax over the whole sequence ------------------------------
    m_prev = m_sc[...]                                               # (1, 1)
    tile_max = jnp.max(jnp.max(beta, axis=1, keepdims=True),
                       axis=0, keepdims=True)
    m_new = jnp.maximum(m_prev, tile_max)
    scale = jnp.exp(m_prev - m_new)
    p = jnp.exp(beta - m_new)                                        # (TNf, G)

    l_sc[...] = scale * l_sc[...] + jnp.sum(
        jnp.sum(p, axis=1, keepdims=True), axis=0, keepdims=True)

    # acc += p^T @ h on the MXU (replaces VPU multiply + XLU sublane reduce).
    t = lax.dot_general(p, hf, (((0,), (0,)), ((), ())),
                        preferred_element_type=jnp.float32)          # (G, G*D)
    acc_sc[...] = scale * acc_sc[...] + t
    m_sc[...] = m_new

    # ---- finalize + store: last sequence tile only ----------------------------
    @pl.when(k == pl.num_programs(1) - 1)
    def _finalize():
        # Keep each group's own D-block of acc, sum the G groups (tiny matmul),
        # and apply the exact softmax normalization (once per batch).
        per_group = jnp.sum(acc_sc[...] * msk_ref[...], axis=0, keepdims=True)
        out = jnp.dot(per_group, r_ref[...], preferred_element_type=jnp.float32)
        out_ref[...] = (out / l_sc[...]).astype(out_ref.dtype)


def prepare_params(weight, bias, u):
    """One-time parameter preprocessing (split + transpose; not per call).

    weight: (O, 2*D), bias: (O,), u: (O, 1)
    returns (w1t (D, O), w2t (D, O), bias_row (1, O), u_col (O, 1)), all f32.
    """
    out_size, two_d = weight.shape
    d = two_d // 2
    w1t = jnp.asarray(weight[:, :d].T, dtype=jnp.float32)
    w2t = jnp.asarray(weight[:, d:].T, dtype=jnp.float32)
    b_row = jnp.asarray(bias, dtype=jnp.float32).reshape(1, out_size)
    u_col = jnp.asarray(u, dtype=jnp.float32).reshape(out_size, 1)
    return w1t, w2t, b_row, u_col


def att_forward(h, attention, params, *, tile_rows=None, vmem_limit_bytes=None):
    """Batched Att forward.

    h:         (B, N, D)  float32 or bfloat16 (bf16 halves HBM traffic)
    attention: (B, 1, D)
    params:    output of prepare_params
    returns:   (B, 1, D) in h.dtype
    """
    w1t, w2t, b_row, u_col = params
    batch, n, d = h.shape
    o = w1t.shape[1]
    if n == 0:
        raise ValueError("Att requires at least one sequence row (N >= 1).")

    # ---- lane packing ---------------------------------------------------------
    # Fold G sequence rows into one kernel row (free row-major reshape, no HBM
    # copy) so tanh/exp/VPU work is lane-dense even when O, D << 128.  Largest
    # G <= 128//O that divides N; G == 1 falls back to the plain layout.
    g_max = max(1, 128 // o)
    g = 1
    for cand in range(min(g_max, n), 0, -1):
        if n % cand == 0:
            g = cand
            break
    nf = n // g
    gd, go = g * d, g * o
    hf = h.reshape(batch, nf, gd)              # free: row-major metadata reshape

    # Per-batch constant (att @ W2^T + b), tiled once per lane group. Tiny XLA.
    proj = attention.reshape(batch, d).astype(jnp.float32) @ w2t + b_row  # (B, O)
    proj_t = jnp.tile(proj[:, None, :], (1, 1, g))                        # (B,1,G*O)

    # Group-packed constants (tiny; constant-folded under jit).
    eye_g = jnp.eye(g, dtype=jnp.float32)
    w1bd = jnp.kron(eye_g, w1t)                               # (G*D, G*O)
    ubd = jnp.kron(eye_g, u_col)                              # (G*O, G)
    msk = jnp.kron(eye_g, jnp.ones((1, d), jnp.float32))      # (G, G*D)
    rmat = jnp.tile(jnp.eye(d, dtype=jnp.float32), (g, 1))    # (G*D, D)

    # ---- sequence tiling ------------------------------------------------------
    # Big tiles so the ~0.35us per-grid-step overhead is amortized; budget is
    # derived per chip (v7x: 64 MiB VMEM / TensorCore, v5e/v6e: 128 MiB).
    try:
        vmem_cap = int(pltpu.get_tpu_info().vmem_capacity_bytes)
    except Exception:
        vmem_cap = 64 * 1024 * 1024            # smallest (v7x per-core) fallback

    row_bytes_f32 = gd * 4                     # budget as f32 even if h is bf16
    if tile_rows is None:
        h_buf_budget = min(vmem_cap // 12, 8 * 1024 * 1024)
        tnf_target = (h_buf_budget // row_bytes_f32) // 8 * 8
    else:
        tnf_target = (max(int(tile_rows), g) // g) // 8 * 8
    tnf_target = max(tnf_target, 8)

    if nf <= tnf_target:
        tile_nf, num_tiles, ragged = nf, 1, False
    else:
        tile_nf = tnf_target                   # multiple of 8 sublanes
        num_tiles = pl.cdiv(nf, tile_nf)
        ragged = (nf % tile_nf) != 0

    if vmem_limit_bytes is None:
        stream_bytes = 2 * tile_nf * gd * h.dtype.itemsize   # double-buffered h
        temp_bytes = 3 * tile_nf * gd * 4                    # f32 upcast + m + slop
        const_bytes = 4 * (gd * go + go * g + g * gd + gd * d + go)
        scratch_bytes = 4 * (g * gd + 2)
        vmem_limit_bytes = (stream_bytes + temp_bytes + 2 * const_bytes
                            + scratch_bytes + (8 << 20))
        vmem_limit_bytes = max(16 << 20,
                               min(vmem_limit_bytes, vmem_cap - (16 << 20)))

    kernel = functools.partial(_att_kernel, tile_nf=tile_nf, nf_valid=nf,
                               ragged=ragged)

    # NOTE(v7x): for very small batch the N-reduction could additionally be
    # split across the two TensorCores (leading parallel axis of size 2 plus a
    # tiny combine); here the batch axis alone is marked "parallel" (megacore).
    return pl.pallas_call(
        kernel,
        out_shape=jax.ShapeDtypeStruct((batch, 1, d), h.dtype),
        grid=(batch, num_tiles),
        in_specs=[
            pl.BlockSpec((None, tile_nf, gd), lambda b, k: (b, k, 0)),  # folded h
            pl.BlockSpec((None, 1, go), lambda b, k: (b, 0, 0)),        # proj row
            pl.BlockSpec((gd, go), lambda b, k: (0, 0)),                # W1 (blockdiag)
            pl.BlockSpec((go, g), lambda b, k: (0, 0)),                 # u  (blockdiag)
            pl.BlockSpec((g, gd), lambda b, k: (0, 0)),                 # group mask
            pl.BlockSpec((gd, d), lambda b, k: (0, 0)),                 # group-sum mat
        ],
        out_specs=pl.BlockSpec((None, 1, d), lambda b, k: (b, 0, 0)),
        scratch_shapes=[
            pltpu.VMEM((1, 1), jnp.float32),     # running max
            pltpu.VMEM((1, 1), jnp.float32),     # running denominator
            pltpu.VMEM((g, gd), jnp.float32),    # running p^T @ h (per group)
        ],
        compiler_params=pltpu.CompilerParams(
            dimension_semantics=("parallel", "arbitrary"),
            vmem_limit_bytes=int(vmem_limit_bytes),
        ),
    )(hf, proj_t, w1bd, ubd, msk, rmat)


def att_reference_single(h, attention, weight, bias, u):
    """Pure-JAX reference for one instance, matching the PyTorch module."""
    n = h.shape[0]
    att_rep = jnp.broadcast_to(attention, (n, attention.shape[-1]))
    m = jnp.tanh(jnp.concatenate([h, att_rep], axis=1) @ weight.T + bias)
    beta = (m @ u).T                       # (1, N)
    alfa = jax.nn.softmax(beta, axis=1)
    return alfa @ h                        # (1, D)


if __name__ == "__main__":
    input_size, output_size = 32, 16

    key = jax.random.PRNGKey(0)
    k_w, k_b, k_u, k_data = jax.random.split(key, 4)

    # Deterministic parameters (xavier_uniform-style bounds), prepared once.
    fan_in_w, fan_out_w = 2 * input_size, output_size
    bound_w = (6.0 / (fan_in_w + fan_out_w)) ** 0.5
    weight = jax.random.uniform(k_w, (output_size, 2 * input_size),
                                minval=-bound_w, maxval=bound_w, dtype=jnp.float32)
    bias = jax.random.uniform(k_b, (output_size,), minval=-0.1, maxval=0.1,
                              dtype=jnp.float32)
    bound_u = (6.0 / (output_size + 1)) ** 0.5
    u = jax.random.uniform(k_u, (output_size, 1), minval=-bound_u, maxval=bound_u,
                           dtype=jnp.float32)
    params = prepare_params(weight, bias, u)

    att_reference = jax.vmap(att_reference_single,
                             in_axes=(0, 0, None, None, None))

    cases = [
        # (batch, seq_len, tile_rows, dtype)
        (2, 8, None, jnp.float32),      # module-like shapes; G=8 fold, 1 tile
        (3, 40, None, jnp.float32),     # G=8 fold, single tile
        (2, 1000, 512, jnp.float32),    # multi-tile online softmax + ragged tail
        (2, 1009, 512, jnp.float32),    # prime N -> G=1 fallback, ragged tail
        (2, 256, 128, jnp.bfloat16),    # bf16-streamed h, multi-tile
    ]
    for batch, n, tile_rows, dtype in cases:
        k_h, k_a, k_data = jax.random.split(k_data, 3)
        h = jax.random.normal(k_h, (batch, n, input_size),
                              dtype=jnp.float32).astype(dtype)
        attention = jax.random.normal(k_a, (batch, 1, input_size),
                                      dtype=jnp.float32).astype(dtype)

        out = att_forward(h, attention, params, tile_rows=tile_rows)
        jax.block_until_ready(out)

        ref = att_reference(h.astype(jnp.float32),
                            attention.astype(jnp.float32), weight, bias, u)
        assert out.shape == (batch, 1, input_size)
        tol = 2e-2 if dtype == jnp.bfloat16 else 1e-3
        err = float(jnp.max(jnp.abs(out.astype(jnp.float32) - ref)))
        assert jnp.allclose(out.astype(jnp.float32), ref, atol=tol, rtol=tol), (
            f"mismatch vs reference for B={batch} N={n} tile_rows={tile_rows}: "
            f"max abs err {err}")

    print("KERNEL_OK")
</pallas_src>

<mosaic_0001>
module attributes {stable_mosaic.version = 11 : i64} {
  func.func @_att_kernel(%arg0: i32, %arg1: i32, %arg2: memref<1x1x256xf32, #tpu.memory_space<vmem>>, %arg3: memref<1x1x128xf32, #tpu.memory_space<vmem>>, %arg4: memref<256x128xf32, #tpu.memory_space<vmem>>, %arg5: memref<128x8xf32, #tpu.memory_space<vmem>>, %arg6: memref<8x256xf32, #tpu.memory_space<vmem>>, %arg7: memref<256x32xf32, #tpu.memory_space<vmem>>, %arg8: memref<1x1x32xf32, #tpu.memory_space<vmem>>, %arg9: memref<1x1xf32, #tpu.memory_space<vmem>>, %arg10: memref<1x1xf32, #tpu.memory_space<vmem>>, %arg11: memref<8x256xf32, #tpu.memory_space<vmem>>) attributes {dimension_semantics = [#tpu.dimension_semantics<parallel>, #tpu.dimension_semantics<arbitrary>], iteration_bounds = array<i64: 2, 1>, scalar_prefetch = 0 : i64, scratch_operands = 3 : i64, tpu.core_type = #tpu.core_type<tc>, window_params = [{transform_indices = @transform_0, window_bounds = array<i64: 1, 1, 256>}, {transform_indices = @transform_1, window_bounds = array<i64: 1, 1, 128>}, {pipeline_mode = #tpu.pipeline_mode<synchronous>, transform_indices = @transform_2, window_bounds = array<i64: 256, 128>}, {pipeline_mode = #tpu.pipeline_mode<synchronous>, transform_indices = @transform_3, window_bounds = array<i64: 128, 8>}, {pipeline_mode = #tpu.pipeline_mode<synchronous>, transform_indices = @transform_4, window_bounds = array<i64: 8, 256>}, {pipeline_mode = #tpu.pipeline_mode<synchronous>, transform_indices = @transform_5, window_bounds = array<i64: 256, 32>}, {transform_indices = @transform_6, window_bounds = array<i64: 1, 1, 32>}]} {
    %c0_i32 = arith.constant 0 : i32
    %0 = arith.cmpi eq, %arg1, %c0_i32 : i32
    %1 = arith.extui %0 : i1 to i32
    %c0_i32_0 = arith.constant 0 : i32
    %2 = arith.cmpi ne, %1, %c0_i32_0 : i32
    scf.if %2 {
      %cst_30 = arith.constant 0xFF800000 : f32
      %42 = vector.broadcast %cst_30 : f32 to vector<1x1xf32>
      %c0_31 = arith.constant 0 : index
      %c0_32 = arith.constant 0 : index
      %43 = vector.load %arg9[%c0_31, %c0_32] : memref<1x1xf32, #tpu.memory_space<vmem>>, vector<1x1xf32>
      tpu.vector_store %arg9[%c0_31, %c0_32], %42 {strides = array<i32>} : memref<1x1xf32, #tpu.memory_space<vmem>>, vector<1x1xf32>,
      %cst_33 = arith.constant 0.000000e+00 : f32
      %44 = vector.broadcast %cst_33 : f32 to vector<1x1xf32>
      %c0_34 = arith.constant 0 : index
      %c0_35 = arith.constant 0 : index
      %45 = vector.load %arg10[%c0_34, %c0_35] : memref<1x1xf32, #tpu.memory_space<vmem>>, vector<1x1xf32>
      tpu.vector_store %arg10[%c0_34, %c0_35], %44 {strides = array<i32>} : memref<1x1xf32, #tpu.memory_space<vmem>>, vector<1x1xf32>,
      %cst_36 = arith.constant 0.000000e+00 : f32
      %46 = vector.broadcast %cst_36 : f32 to vector<8x256xf32>
      %c0_37 = arith.constant 0 : index
      %c0_38 = arith.constant 0 : index
      %47 = vector.load %arg11[%c0_37, %c0_38] : memref<8x256xf32, #tpu.memory_space<vmem>>, vector<8x256xf32>
      tpu.vector_store %arg11[%c0_37, %c0_38], %46 {strides = array<i32>} : memref<8x256xf32, #tpu.memory_space<vmem>>, vector<8x256xf32>,
    } else {
    }
    %c0 = arith.constant 0 : index
    %c0_1 = arith.constant 0 : index
    %c0_2 = arith.constant 0 : index
    %3 = vector.load %arg2[%c0, %c0_1, %c0_2] : memref<1x1x256xf32, #tpu.memory_space<vmem>>, vector<1x1x256xf32>
    %4 = vector.shape_cast %3 : vector<1x1x256xf32> to vector<1x256xf32>
    %c0_3 = arith.constant 0 : index
    %c0_4 = arith.constant 0 : index
    %5 = vector.load %arg4[%c0_3, %c0_4] : memref<256x128xf32, #tpu.memory_space<vmem>>, vector<256x128xf32>
    %cst = arith.constant dense<0.000000e+00> : vector<1x128xf32>
    %6 = tpu.matmul %4, %5, %cst {dimension_numbers = #tpu.dot_dimension_numbers<[1], [0], [0], [1], [0, 0, 1, 1], [], []>} : vector<1x256xf32>, vector<256x128xf32>, vector<1x128xf32> -> vector<1x128xf32>
    %c0_5 = arith.constant 0 : index
    %c0_6 = arith.constant 0 : index
    %c0_7 = arith.constant 0 : index
    %7 = vector.load %arg3[%c0_5, %c0_6, %c0_7] : memref<1x1x128xf32, #tpu.memory_space<vmem>>, vector<1x1x128xf32>
    %8 = vector.shape_cast %7 : vector<1x1x128xf32> to vector<1x128xf32>
    %9 = arith.addf %6, %8 : vector<1x128xf32>
    %10 = math.tanh %9 : vector<1x128xf32>
    %c0_8 = arith.constant 0 : index
    %c0_9 = arith.constant 0 : index
    %11 = vector.load %arg5[%c0_8, %c0_9] : memref<128x8xf32, #tpu.memory_space<vmem>>, vector<128x8xf32>
    %cst_10 = arith.constant dense<0.000000e+00> : vector<1x8xf32>
    %12 = tpu.matmul %10, %11, %cst_10 {dimension_numbers = #tpu.dot_dimension_numbers<[1], [0], [0], [1], [0, 0, 1, 1], [], []>} : vector<1x128xf32>, vector<128x8xf32>, vector<1x8xf32> -> vector<1x8xf32>
    %c0_11 = arith.constant 0 : index
    %c0_12 = arith.constant 0 : index
    %13 = vector.load %arg9[%c0_11, %c0_12] : memref<1x1xf32, #tpu.memory_space<vmem>>, vector<1x1xf32>
    %cst_13 = arith.constant dense<0xFF800000> : vector<1xf32>
    %14 = vector.multi_reduction <maximumf>, %12, %cst_13 [1] : vector<1x8xf32> to vector<1xf32>
    %15 = vector.shape_cast %14 : vector<1xf32> to vector<1x1xf32>
    %cst_14 = arith.constant dense<0xFF800000> : vector<1xf32>
    %16 = vector.multi_reduction <maximumf>, %15, %cst_14 [0] : vector<1x1xf32> to vector<1xf32>
    %17 = vector.shape_cast %16 : vector<1xf32> to vector<1x1xf32>
    %18 = arith.maximumf %13, %17 : vector<1x1xf32>
    %19 = arith.subf %13, %18 : vector<1x1xf32>
    %20 = math.exp %19 : vector<1x1xf32>
    %21 = vector.broadcast %18 : vector<1x1xf32> to vector<1x8xf32>
    %22 = arith.subf %12, %21 : vector<1x8xf32>
    %23 = math.exp %22 : vector<1x8xf32>
    %c0_15 = arith.constant 0 : index
    %c0_16 = arith.constant 0 : index
    %24 = vector.load %arg10[%c0_15, %c0_16] : memref<1x1xf32, #tpu.memory_space<vmem>>, vector<1x1xf32>
    %25 = arith.mulf %20, %24 : vector<1x1xf32>
    %cst_17 = arith.constant dense<0.000000e+00> : vector<1xf32>
    %26 = vector.multi_reduction <add>, %23, %cst_17 [1] : vector<1x8xf32> to vector<1xf32>
    %27 = vector.shape_cast %26 : vector<1xf32> to vector<1x1xf32>
    %cst_18 = arith.constant dense<0.000000e+00> : vector<1xf32>
    %28 = vector.multi_reduction <add>, %27, %cst_18 [0] : vector<1x1xf32> to vector<1xf32>
    %29 = vector.shape_cast %28 : vector<1xf32> to vector<1x1xf32>
    %30 = arith.addf %25, %29 : vector<1x1xf32>
    %c0_19 = arith.constant 0 : index
    %c0_20 = arith.constant 0 : index
    %31 = vector.load %arg10[%c0_19, %c0_20] : memref<1x1xf32, #tpu.memory_space<vmem>>, vector<1x1xf32>
    tpu.vector_store %arg10[%c0_19, %c0_20], %30 {strides = array<i32>} : memref<1x1xf32, #tpu.memory_space<vmem>>, vector<1x1xf32>,
    %cst_21 = arith.constant dense<0.000000e+00> : vector<8x256xf32>
    %32 = tpu.matmul %23, %4, %cst_21 {dimension_numbers = #tpu.dot_dimension_numbers<[0], [0], [1], [1], [0, 1, 1, 1], [], []>} : vector<1x8xf32>, vector<1x256xf32>, vector<8x256xf32> -> vector<8x256xf32>
    %c0_22 = arith.constant 0 : index
    %c0_23 = arith.constant 0 : index
    %33 = vector.load %arg11[%c0_22, %c0_23] : memref<8x256xf32, #tpu.memory_space<vmem>>, vector<8x256xf32>
    %34 = vector.broadcast %20 : vector<1x1xf32> to vector<8x256xf32>
    %35 = arith.mulf %34, %33 : vector<8x256xf32>
    %36 = arith.addf %35, %32 : vector<8x256xf32>
    %c0_24 = arith.constant 0 : index
    %c0_25 = arith.constant 0 : index
    %37 = vector.load %arg11[%c0_24, %c0_25] : memref<8x256xf32, #tpu.memory_space<vmem>>, vector<8x256xf32>
    tpu.vector_store %arg11[%c0_24, %c0_25], %36 {strides = array<i32>} : memref<8x256xf32, #tpu.memory_space<vmem>>, vector<8x256xf32>,
    %c0_26 = arith.constant 0 : index
    %c0_27 = arith.constant 0 : index
    %38 = vector.load %arg9[%c0_26, %c0_27] : memref<1x1xf32, #tpu.memory_space<vmem>>, vector<1x1xf32>
    tpu.vector_store %arg9[%c0_26, %c0_27], %18 {strides = array<i32>} : memref<1x1xf32, #tpu.memory_space<vmem>>, vector<1x1xf32>,
    %c0_i32_28 = arith.constant 0 : i32
    %39 = arith.cmpi eq, %arg1, %c0_i32_28 : i32
    %40 = arith.extui %39 : i1 to i32
    %c0_i32_29 = arith.constant 0 : i32
    %41 = arith.cmpi ne, %40, %c0_i32_29 : i32
    scf.if %41 {
      %c0_30 = arith.constant 0 : index
      %c0_31 = arith.constant 0 : index
      %42 = vector.load %arg11[%c0_30, %c0_31] : memref<8x256xf32, #tpu.memory_space<vmem>>, vector<8x256xf32>
      %c0_32 = arith.constant 0 : index
      %c0_33 = arith.constant 0 : index
      %43 = vector.load %arg6[%c0_32, %c0_33] : memref<8x256xf32, #tpu.memory_space<vmem>>, vector<8x256xf32>
      %44 = arith.mulf %42, %43 : vector<8x256xf32>
      %cst_34 = arith.constant dense<0.000000e+00> : vector<256xf32>
      %45 = vector.multi_reduction <add>, %44, %cst_34 [0] : vector<8x256xf32> to vector<256xf32>
      %46 = vector.shape_cast %45 : vector<256xf32> to vector<1x256xf32>
      %c0_35 = arith.constant 0 : index
      %c0_36 = arith.constant 0 : index
      %47 = vector.load %arg7[%c0_35, %c0_36] : memref<256x32xf32, #tpu.memory_space<vmem>>, vector<256x32xf32>
      %cst_37 = arith.constant dense<0.000000e+00> : vector<1x32xf32>
      %48 = tpu.matmul %46, %47, %cst_37 {dimension_numbers = #tpu.dot_dimension_numbers<[1], [0], [0], [1], [0, 0, 1, 1], [], []>} : vector<1x256xf32>, vector<256x32xf32>, vector<1x32xf32> -> vector<1x32xf32>
      %c0_38 = arith.constant 0 : index
      %c0_39 = arith.constant 0 : index
      %49 = vector.load %arg10[%c0_38, %c0_39] : memref<1x1xf32, #tpu.memory_space<vmem>>, vector<1x1xf32>
      %50 = vector.broadcast %49 : vector<1x1xf32> to vector<1x32xf32>
      %51 = arith.divf %48, %50 : vector<1x32xf32>
      %c0_40 = arith.constant 0 : index
      %c0_41 = arith.constant 0 : index
      %c0_42 = arith.constant 0 : index
      %52 = vector.load %arg8[%c0_40, %c0_41, %c0_42] : memref<1x1x32xf32, #tpu.memory_space<vmem>>, vector<1x1x32xf32>
      %53 = vector.shape_cast %52 : vector<1x1x32xf32> to vector<1x32xf32>
      %54 = vector.shape_cast %51 : vector<1x32xf32> to vector<1x1x32xf32>
      tpu.vector_store %arg8[%c0_40, %c0_41, %c0_42], %54 {strides = array<i32>} : memref<1x1x32xf32, #tpu.memory_space<vmem>>, vector<1x1x32xf32>,
    } else {
    }
    return
  }
  func.func @transform_0(%arg0: i32, %arg1: i32) -> (i32, i32, i32) {
    %c0_i32 = arith.constant 0 : i32
    %c0_i32_0 = arith.constant 0 : i32
    return %arg0, %arg1, %c0_i32 : i32, i32, i32
  }
  func.func @transform_1(%arg0: i32, %arg1: i32) -> (i32, i32, i32) {
    %c0_i32 = arith.constant 0 : i32
    %c0_i32_0 = arith.constant 0 : i32
    %c0_i32_1 = arith.constant 0 : i32
    return %arg0, %c0_i32, %c0_i32_0 : i32, i32, i32
  }
  func.func @transform_2(%arg0: i32, %arg1: i32) -> (i32, i32) {
    %c0_i32 = arith.constant 0 : i32
    %c0_i32_0 = arith.constant 0 : i32
    %c0_i32_1 = arith.constant 0 : i32
    return %c0_i32, %c0_i32_0 : i32, i32
  }
  func.func @transform_3(%arg0: i32, %arg1: i32) -> (i32, i32) {
    %c0_i32 = arith.constant 0 : i32
    %c0_i32_0 = arith.constant 0 : i32
    %c0_i32_1 = arith.constant 0 : i32
    return %c0_i32, %c0_i32_0 : i32, i32
  }
  func.func @transform_4(%arg0: i32, %arg1: i32) -> (i32, i32) {
    %c0_i32 = arith.constant 0 : i32
    %c0_i32_0 = arith.constant 0 : i32
    %c0_i32_1 = arith.constant 0 : i32
    return %c0_i32, %c0_i32_0 : i32, i32
  }
  func.func @transform_5(%arg0: i32, %arg1: i32) -> (i32, i32) {
    %c0_i32 = arith.constant 0 : i32
    %c0_i32_0 = arith.constant 0 : i32
    %c0_i32_1 = arith.constant 0 : i32
    return %c0_i32, %c0_i32_0 : i32, i32
  }
  func.func @transform_6(%arg0: i32, %arg1: i32) -> (i32, i32, i32) {
    %c0_i32 = arith.constant 0 : i32
    %c0_i32_0 = arith.constant 0 : i32
    %c0_i32_1 = arith.constant 0 : i32
    return %arg0, %c0_i32, %c0_i32_0 : i32, i32, i32
  }
}

</mosaic_0001>

<llo_original>
// kernel: tpu_custom_call.1
$region0: #{tpu_custom_call.1}
  #allocation0 [shape = 'u32[]', space=smem, size = 0x4, offset = 0x4, fixed_abs, tag = 'smem constant byte address 0x4 - core index']
  #allocation1 [shape = 'u32[144,128]{1,0:T(1,128)}', space=vmem, size = 0x12000, scoped, tag = 'internal scratch']
  #allocation2 [shape = 'f32[1,1]{1,0:T(1,128)}', space=vmem, size = 0x200, scoped, tag = 'scratch operand']
  #allocation3 [shape = 'f32[1,1]{1,0:T(1,128)}', space=vmem, size = 0x200, scoped, tag = 'scratch operand']
  #allocation4 [shape = 'f32[8,256]{1,0:T(8,128)}', space=vmem, size = 0x2000, scoped, tag = 'scratch operand']
  %s0 = inlined_call_operand.vmem [shape: f32[2,1,256], index: 0, kind: input, shape index: {}]
  %s1 = inlined_call_operand.vmem [shape: f32[2,1,128], index: 1, kind: input, shape index: {}]
  %s2 = inlined_call_operand.vmem [shape: f32[256,128], index: 2, kind: input, shape index: {}]
  %s3 = inlined_call_operand.vmem [shape: f32[128,8], index: 3, kind: input, shape index: {}]
  %s4 = inlined_call_operand.vmem [shape: f32[8,256], index: 4, kind: input, shape index: {}]
  %s5 = inlined_call_operand.vmem [shape: f32[256,32], index: 5, kind: input, shape index: {}]
  %s6 = inlined_call_operand.hbm [shape: f32[2,1,32], index: 6, kind: output, shape index: {}]
  %s7 = sld [smem:[#allocation0]]
  $region65: #{tpu_custom_call.1} parent=0
    _
  %s9 = ssub.s32 1, %s7
  %s10 = scalar_select 0, %s9, %s7
  $region1: #{tpu_custom_call.1} parent=0
    #allocation5 [shape = 'u8[1024]{0}', space=vmem, size = 0x400, scoped, tag = 'output window, operand 0']
    #allocation6 [shape = 's32[2]{0}', space=sflag, size = 0x8, scoped, tag = 'scoped memory for tpu_custom_call.1']
    %11 = vsyncpa [#allocation6], 0
    %s12 = scalar_lea.sflag [#allocation6], 1
    %13 = vsyncpa %s12, 0
    loop: start=0, step=1, limit=4
    $region2: #{tpu_custom_call.1} parent=1 // loop_pre_header
      _
    $region3: #{tpu_custom_call.1} parent=1 // loop_header
      %s15 = sphi 0, %s19
      %p16 = scmp.ge.s32.totalorder %s15, 4
      %s22 = sphi 0, %s34
      %s23 = sphi 0, %s30
      %s24 = sphi 0, %s22
      %s25 = sphi 0, %s23
      %s26 = sphi 0, %s24
      %s27 = sphi 0, %s25
      %s39 = sphi 0, %s41
      %s42 = sphi 0, %s39
      %s43 = sphi 0, %s42
      %s59 = sphi 0, %s43
      %s65 = sphi 0, %s67
      %s68 = sphi 0, %s65
      %s69 = sphi 0, %s68
      %s85 = sphi 0, %s69
      %s89 = sphi 0, %s89
      %s91 = sphi 0, %s89
      %s92 = sphi 0, %s91
      %s106 = sphi 0, %s92
      %s110 = sphi 0, %s110
      %s112 = sphi 0, %s110
      %s113 = sphi 0, %s112
      %s127 = sphi 0, %s113
      %s131 = sphi 0, %s131
      %s133 = sphi 0, %s131
      %s134 = sphi 0, %s133
      %s148 = sphi 0, %s134
      %s152 = sphi 0, %s152
      %s154 = sphi 0, %s152
      %s155 = sphi 0, %s154
      %s169 = sphi 0, %s155
      %s175 = sphi 0, %s177
      %s178 = sphi 0, %s175
      %s179 = sphi 0, %s178
      %s195 = sphi 0, %s179
    $region4: #{tpu_custom_call.1} parent=1 // loop_header_branch
      %18 = sbr.rel (%p16) target = $region8
    $region5: #{tpu_custom_call.1} parent=1 // loop_body
      %s20 = ssub.s32 %s15, 1
      %s21 = ssub.s32 %s15, 2
      %s28 = sadd.s32 1, %s23
      %p29 = scmp.ge.s32.totalorder %s28, 1
      %s30 = scalar_select %p29, 0, %s28
      %s31 = sadd.s32 1, %s22
      %s32 = scalar_select %p29, %s31, %s22
      %p33 = scmp.ge.s32.totalorder %s32, 2
      %s34 = scalar_select %p33, 0, %s32
      %s35 = ssub.s32 %s22, %s34
      %s36 = ssub.s32 %s23, %s30
      %s37 = sor.u32 %s35, %s36
      %p38 = scmp.eq.s32.totalorder %s37, 0
      %s40 = sadd.s32 %s39, 1
      %s41 = scalar_select %p38, %s39, %s40
      %p44 = pneg %p38
      %p45 = scmp.eq.s32.totalorder %s15, 1
      %p46 = por %p44, %p45
      %p47 = scmp.ne.s32.totalorder %s39, %s42
      %p48 = scmp.eq.s32.totalorder %s15, 0
      %p49 = por %p47, %p48
      %p50 = scmp.ne.s32.totalorder %s39, %s42
      %p51 = scmp.eq.s32.totalorder %s20, 1
      %p52 = por %p50, %p51
      %p53 = scmp.ne.s32.totalorder %s42, %s43
      %p54 = scmp.eq.s32.totalorder %s20, 0
      %p55 = por %p53, %p54
      %p56 = scmp.ne.s32.totalorder %s42, %s43
      %p57 = scmp.eq.s32.totalorder %s21, 1
      %p58 = por %p56, %p57
      %p60 = scmp.ne.s32.totalorder %s43, %s59
      %p61 = scmp.eq.s32.totalorder %s21, 0
      %p62 = por %p60, %p61
      %s63 = ssub.s32 %s22, %s34
      %p64 = scmp.eq.s32.totalorder %s63, 0
      %s66 = sadd.s32 %s65, 1
      %s67 = scalar_select %p64, %s65, %s66
      %p70 = pneg %p64
      %p71 = scmp.eq.s32.totalorder %s15, 1
      %p72 = por %p70, %p71
      %p73 = scmp.ne.s32.totalorder %s65, %s68
      %p74 = scmp.eq.s32.totalorder %s15, 0
      %p75 = por %p73, %p74
      %p76 = scmp.ne.s32.totalorder %s65, %s68
      %p77 = scmp.eq.s32.totalorder %s20, 1
      %p78 = por %p76, %p77
      %p79 = scmp.ne.s32.totalorder %s68, %s69
      %p80 = scmp.eq.s32.totalorder %s20, 0
      %p81 = por %p79, %p80
      %p82 = scmp.ne.s32.totalorder %s68, %s69
      %p83 = scmp.eq.s32.totalorder %s21, 1
      %p84 = por %p82, %p83
      %p86 = scmp.ne.s32.totalorder %s69, %s85
      %p87 = scmp.eq.s32.totalorder %s21, 0
      %p88 = por %p86, %p87
      %s90 = sadd.s32 %s89, 1
      %p93 = scmp.eq.s32.totalorder %s15, 1
      %p94 = scmp.ne.s32.totalorder %s89, %s91
      %p95 = scmp.eq.s32.totalorder %s15, 0
      %p96 = por %p94, %p95
      %p97 = scmp.ne.s32.totalorder %s89, %s91
      %p98 = scmp.eq.s32.totalorder %s20, 1
      %p99 = por %p97, %p98
      %p100 = scmp.ne.s32.totalorder %s91, %s92
      %p101 = scmp.eq.s32.totalorder %s20, 0
      %p102 = por %p100, %p101
      %p103 = scmp.ne.s32.totalorder %s91, %s92
      %p104 = scmp.eq.s32.totalorder %s21, 1
      %p105 = por %p103, %p104
      %p107 = scmp.ne.s32.totalorder %s92, %s106
      %p108 = scmp.eq.s32.totalorder %s21, 0
      %p109 = por %p107, %p108
      %s111 = sadd.s32 %s110, 1
      %p114 = scmp.eq.s32.totalorder %s15, 1
      %p115 = scmp.ne.s32.totalorder %s110, %s112
      %p116 = scmp.eq.s32.totalorder %s15, 0
      %p117 = por %p115, %p116
      %p118 = scmp.ne.s32.totalorder %s110, %s112
      %p119 = scmp.eq.s32.totalorder %s20, 1
      %p120 = por %p118, %p119
      %p121 = scmp.ne.s32.totalorder %s112, %s113
      %p122 = scmp.eq.s32.totalorder %s20, 0
      %p123 = por %p121, %p122
      %p124 = scmp.ne.s32.totalorder %s112, %s113
      %p125 = scmp.eq.s32.totalorder %s21, 1
      %p126 = por %p124, %p125
      %p128 = scmp.ne.s32.totalorder %s113, %s127
      %p129 = scmp.eq.s32.totalorder %s21, 0
      %p130 = por %p128, %p129
      %s132 = sadd.s32 %s131, 1
      %p135 = scmp.eq.s32.totalorder %s15, 1
      %p136 = scmp.ne.s32.totalorder %s131, %s133
      %p137 = scmp.eq.s32.totalorder %s15, 0
      %p138 = por %p136, %p137
      %p139 = scmp.ne.s32.totalorder %s131, %s133
      %p140 = scmp.eq.s32.totalorder %s20, 1
      %p141 = por %p139, %p140
      %p142 = scmp.ne.s32.totalorder %s133, %s134
      %p143 = scmp.eq.s32.totalorder %s20, 0
      %p144 = por %p142, %p143
      %p145 = scmp.ne.s32.totalorder %s133, %s134
      %p146 = scmp.eq.s32.totalorder %s21, 1
      %p147 = por %p145, %p146
      %p149 = scmp.ne.s32.totalorder %s134, %s148
      %p150 = scmp.eq.s32.totalorder %s21, 0
      %p151 = por %p149, %p150
      %s153 = sadd.s32 %s152, 1
      %p156 = scmp.eq.s32.totalorder %s15, 1
      %p157 = scmp.ne.s32.totalorder %s152, %s154
      %p158 = scmp.eq.s32.totalorder %s15, 0
      %p159 = por %p157, %p158
      %p160 = scmp.ne.s32.totalorder %s152, %s154
      %p161 = scmp.eq.s32.totalorder %s20, 1
      %p162 = por %p160, %p161
      %p163 = scmp.ne.s32.totalorder %s154, %s155
      %p164 = scmp.eq.s32.totalorder %s20, 0
      %p165 = por %p163, %p164
      %p166 = scmp.ne.s32.totalorder %s154, %s155
      %p167 = scmp.eq.s32.totalorder %s21, 1
      %p168 = por %p166, %p167
      %p170 = scmp.ne.s32.totalorder %s155, %s169
      %p171 = scmp.eq.s32.totalorder %s21, 0
      %p172 = por %p170, %p171
      %s173 = ssub.s32 %s22, %s34
      %p174 = scmp.eq.s32.totalorder %s173, 0
      %s176 = sadd.s32 %s175, 1
      %s177 = scalar_select %p174, %s175, %s176
      %p180 = pneg %p174
      %p181 = scmp.eq.s32.totalorder %s15, 1
      %p182 = por %p180, %p181
      %p183 = scmp.ne.s32.totalorder %s175, %s178
      %p184 = scmp.eq.s32.totalorder %s15, 0
      %p185 = por %p183, %p184
      %p186 = scmp.ne.s32.totalorder %s175, %s178
      %p187 = scmp.eq.s32.totalorder %s20, 1
      %p188 = por %p186, %p187
      %p189 = scmp.ne.s32.totalorder %s178, %s179
      %p190 = scmp.eq.s32.totalorder %s20, 0
      %p191 = por %p189, %p190
      %p192 = scmp.ne.s32.totalorder %s178, %s179
      %p193 = scmp.eq.s32.totalorder %s21, 1
      %p194 = por %p192, %p193
      %p196 = scmp.ne.s32.totalorder %s179, %s195
      %p197 = scmp.eq.s32.totalorder %s21, 0
      %p198 = por %p196, %p197
      %p199 = scmp.le.s32.totalorder 1, %s15
      %p200 = scmp.lt.s32.totalorder %s15, 3
      %p201 = pnand %p199, %p200
      %p202 = pneg %p201
      // Predicated region
      $region9: #{tpu_custom_call.1} parent=5 // pred_check
        _
      $region10: #{tpu_custom_call.1} parent=5 // pred_check_branch
        %204 = sbr.rel (%p201) target = $region12
      $region11: #{tpu_custom_call.1} parent=5 // pred_region
        %s205 = ssub.s32 %s15, 1
        // Predicated region
        $region13: #{tpu_custom_call.1} parent=11 // pred_check
          %p206 = pneg %p102
        $region14: #{tpu_custom_call.1} parent=11 // pred_check_branch
          %208 = sbr.rel (%p206) target = $region16
        $region15: #{tpu_custom_call.1} parent=11 // pred_region
          _
        $region16: #{tpu_custom_call.1} parent=11 // pred_fallthru
          _
        // Predicated region
        $region17: #{tpu_custom_call.1} parent=11 // pred_check
          %p209 = pneg %p123
        $region18: #{tpu_custom_call.1} parent=11 // pred_check_branch
          %211 = sbr.rel (%p209) target = $region20
        $region19: #{tpu_custom_call.1} parent=11 // pred_region
          _
        $region20: #{tpu_custom_call.1} parent=11 // pred_fallthru
          _
        // Predicated region
        $region21: #{tpu_custom_call.1} parent=11 // pred_check
          %p212 = pneg %p144
        $region22: #{tpu_custom_call.1} parent=11 // pred_check_branch
          %214 = sbr.rel (%p212) target = $region24
        $region23: #{tpu_custom_call.1} parent=11 // pred_region
          _
        $region24: #{tpu_custom_call.1} parent=11 // pred_fallthru
          _
        // Predicated region
        $region25: #{tpu_custom_call.1} parent=11 // pred_check
          %p215 = pneg %p165
        $region26: #{tpu_custom_call.1} parent=11 // pred_check_branch
          %217 = sbr.rel (%p215) target = $region28
        $region27: #{tpu_custom_call.1} parent=11 // pred_region
          _
        $region28: #{tpu_custom_call.1} parent=11 // pred_fallthru
          _
      $region12: #{tpu_custom_call.1} parent=5 // pred_fallthru
        _
      %p218 = scmp.lt.s32.totalorder %s15, 2
      // Predicated region
      $region29: #{tpu_custom_call.1} parent=5 // pred_check
        %p219 = pneg %p218
      $region30: #{tpu_custom_call.1} parent=5 // pred_check_branch
        %221 = sbr.rel (%p219) target = $region32
      $region31: #{tpu_custom_call.1} parent=5 // pred_region
        // Predicated region
        $region33: #{tpu_custom_call.1} parent=31 // pred_check
          %p222 = pneg %p49
        $region34: #{tpu_custom_call.1} parent=31 // pred_check_branch
          %224 = sbr.rel (%p222) target = $region36
        $region35: #{tpu_custom_call.1} parent=31 // pred_region
          %p225 = scmp.lt.s32.totalorder %s22, 1
          %s226 = scalar_select %p225, %s22, 1
          %p227 = scmp.lt.s32.totalorder %s23, 0
          %s228 = scalar_select %p227, %s23, 0
          %s229 = smul.addr %s228, 2
          %s230 = smul.addr %s226, 2
          %s231 = sadd.s32 %s229, %s230
          %s232 = scalar_lea.vmem %s0, %s231
        $region36: #{tpu_custom_call.1} parent=31 // pred_fallthru
          _
        // Predicated region
        $region37: #{tpu_custom_call.1} parent=31 // pred_check
          %p233 = pneg %p75
        $region38: #{tpu_custom_call.1} parent=31 // pred_check_branch
          %235 = sbr.rel (%p233) target = $region40
        $region39: #{tpu_custom_call.1} parent=31 // pred_region
          %p236 = scmp.lt.s32.totalorder %s22, 1
          %s237 = scalar_select %p236, %s22, 1
          %s238 = scalar_lea.vmem %s1, %s237
        $region40: #{tpu_custom_call.1} parent=31 // pred_fallthru
          _
      $region32: #{tpu_custom_call.1} parent=5 // pred_fallthru
        _
      %p239 = scmp.le.s32.totalorder 1, %s15
      %p240 = scmp.lt.s32.totalorder %s15, 3
      %p241 = pnand %p239, %p240
      %p242 = pneg %p241
      // Predicated region
      $region41: #{tpu_custom_call.1} parent=5 // pred_check
        _
      $region42: #{tpu_custom_call.1} parent=5 // pred_check_branch
        %244 = sbr.rel (%p241) target = $region44
      $region43: #{tpu_custom_call.1} parent=5 // pred_region
        %s245 = ssub.s32 %s15, 1
        %p246 = scmp.lt.s32.totalorder %s24, 1
        %s247 = scalar_select %p246, %s24, 1
        %p248 = scmp.lt.s32.totalorder %s25, 0
        %s249 = scalar_select %p248, %s25, 0
        %s250 = smul.addr %s249, 2
        %s251 = smul.addr %s247, 2
        %s252 = sadd.s32 %s250, %s251
        %s253 = scalar_lea.vmem %s0, %s252
        %p254 = pneg %p55
        %p255 = pneg %p52
        %p256 = scmp.lt.s32.totalorder %s24, 1
        %s257 = scalar_select %p256, %s24, 1
        %s258 = scalar_lea.vmem %s1, %s257
        %p259 = pneg %p81
        %p260 = pneg %p78
        %p261 = pneg %p102
        %p262 = pneg %p99
        %p263 = pneg %p123
        %p264 = pneg %p120
        %p265 = pneg %p144
        %p266 = pneg %p141
        %p267 = pneg %p165
        %p268 = pneg %p162
        %p269 = pneg %p191
        %p270 = pneg %p188
        %s271 = sand.u32 %s178, 1
        %s272 = scalar_lea.sflag [#allocation6], %s271
        %s273 = sand.u32 %s178, 1
        %s274 = scalar_lea.vmem [#allocation5], %s273
        %p275 = scmp.lt.s32.totalorder %s24, 1
        %s276 = scalar_select %p275, %s24, 1
        %p277 = scmp.lt.s32.totalorder %s25, 0
        %s278 = scalar_select %p277, %s25, 0
        %s279 = smul.addr %s278, 2
        %s280 = smul.addr %s276, 2
        %s281 = sadd.s32 %s279, %s280
        %s282 = scalar_lea.vmem %s0, %s281
        %p283 = scmp.lt.s32.totalorder %s24, 1
        %s284 = scalar_select %p283, %s24, 1
        %s285 = scalar_lea.vmem %s1, %s284
        %p286 = scmp.eq.s32.totalorder %s25, 0
        // Predicated region
        $region45: #{tpu_custom_call.1} parent=43 // pred_check
          %p287 = pneg %p286
        $region46: #{tpu_custom_call.1} parent=43 // pred_check_branch
          %289 = sbr.rel (%p287) target = $region48
        $region47: #{tpu_custom_call.1} parent=43 // pred_region
          %vm290 = vcmask 0
          %291 = vst.msk [vmem:[#allocation2] sm:$0x1] %vm290, -inf
          %292 = vst.msk [vmem:[#allocation3] sm:$0x1] %vm290, 0.0
          %293 = vst [vmem:[#allocation4] sm:$0xff] 0.0
          %294 = vst [vmem:[#allocation4 + $0x8] sm:$0xff] 0.0
        $region48: #{tpu_custom_call.1} parent=43 // pred_fallthru
          _
        %v295 = vld [vmem:[%s282] sm:$0x3]
        %v296 = vld [vmem:[%s2] sm:$0xff]
        %v297 = vld [vmem:[%s2 + $0x8] sm:$0xff]
        %v298 = vld [vmem:[%s2 + $0x10] sm:$0xff]
        %v299 = vld [vmem:[%s2 + $0x18] sm:$0xff]
        %v300 = vld [vmem:[%s2 + $0x20] sm:$0xff]
        %v301 = vld [vmem:[%s2 + $0x28] sm:$0xff]
        %v302 = vld [vmem:[%s2 + $0x30] sm:$0xff]
        %v303 = vld [vmem:[%s2 + $0x38] sm:$0xff]
        %v304 = vld [vmem:[%s2 + $0x40] sm:$0xff]
        %v305 = vld [vmem:[%s2 + $0x48] sm:$0xff]
        %v306 = vld [vmem:[%s2 + $0x50] sm:$0xff]
        %v307 = vld [vmem:[%s2 + $0x58] sm:$0xff]
        %v308 = vld [vmem:[%s2 + $0x60] sm:$0xff]
        %v309 = vld [vmem:[%s2 + $0x68] sm:$0xff]
        %v310 = vld [vmem:[%s2 + $0x70] sm:$0xff]
        %v311 = vld [vmem:[%s2 + $0x78] sm:$0xff]
        %v312 = vld [vmem:[%s2 + $0x80] sm:$0xff]
        %v313 = vld [vmem:[%s2 + $0x88] sm:$0xff]
        %v314 = vld [vmem:[%s2 + $0x90] sm:$0xff]
        %v315 = vld [vmem:[%s2 + $0x98] sm:$0xff]
        %v316 = vld [vmem:[%s2 + $0xa0] sm:$0xff]
        %v317 = vld [vmem:[%s2 + $0xa8] sm:$0xff]
        %v318 = vld [vmem:[%s2 + $0xb0] sm:$0xff]
        %v319 = vld [vmem:[%s2 + $0xb8] sm:$0xff]
        %v320 = vld [vmem:[%s2 + $0xc0] sm:$0xff]
        %v321 = vld [vmem:[%s2 + $0xc8] sm:$0xff]
        %v322 = vld [vmem:[%s2 + $0xd0] sm:$0xff]
        %v323 = vld [vmem:[%s2 + $0xd8] sm:$0xff]
        %v324 = vld [vmem:[%s2 + $0xe0] sm:$0xff]
        %v325 = vld [vmem:[%s2 + $0xe8] sm:$0xff]
        %v326 = vld [vmem:[%s2 + $0xf0] sm:$0xff]
        %v327 = vld [vmem:[%s2 + $0xf8] sm:$0xff]
        %v328 = vld [vmem:[%s285] sm:$0x1]
        %v330 = vlaneseq
        %v331 = vshrl.u32 %v330, 7
        %v332 = vsub.s32 0, %v331
        %v333 = vrot.slane %v295, %v332
        %v334 = vlaneseq
        %v335 = vshrl.u32 %v334, 7
        %v336 = vsub.s32 1, %v335
        %v337 = vrot.slane %v295, %v336
        %340 = vmatprep.subr.mxu0 0.0
        %341 = vmatpush1.msra.mxu0 %v311
        %342 = vmatprep.subr.mxu0 0.0
        %343 = vmatpush1.msra.mxu0 %v310
        %344 = vmatprep.subr.mxu0 0.0
        %345 = vmatpush1.msra.mxu0 %v309
        %346 = vmatprep.subr.mxu0 0.0
        %347 = vmatpush1.msra.mxu0 %v308
        %348 = vmatprep.subr.mxu0 0.0
        %349 = vmatpush1.msra.mxu0 %v307
        %350 = vmatprep.subr.mxu0 0.0
        %351 = vmatpush1.msra.mxu0 %v306
        %352 = vmatprep.subr.mxu0 0.0
        %353 = vmatpush1.msra.mxu0 %v305
        %354 = vmatprep.subr.mxu0 0.0
        %355 = vmatpush1.msra.mxu0 %v304
        %356 = vmatprep.subr.mxu0 0.0
        %357 = vmatpush1.msra.mxu0 %v303
        %358 = vmatprep.subr.mxu0 0.0
        %359 = vmatpush1.msra.mxu0 %v302
        %360 = vmatprep.subr.mxu0 0.0
        %361 = vmatpush1.msra.mxu0 %v301
        %362 = vmatprep.subr.mxu0 0.0
        %363 = vmatpush1.msra.mxu0 %v300
        %364 = vmatprep.subr.mxu0 0.0
        %365 = vmatpush1.msra.mxu0 %v299
        %366 = vmatprep.subr.mxu0 0.0
        %367 = vmatpush1.msra.mxu0 %v298
        %368 = vmatprep.subr.mxu0 0.0
        %369 = vmatpush1.msra.mxu0 %v297
        %370 = vmatprep.subr.mxu0 0.0
        %371 = vmatpush1.msra.mxu0 %v296
        %372 = vmatprep.subr.mxu0 0.0
        %373 = vmatpush2.msra.mxu0 %v327
        %374 = vmatprep.subr.mxu0 0.0
        %375 = vmatpush2.msra.mxu0 %v326
        %376 = vmatprep.subr.mxu0 0.0
        %377 = vmatpush2.msra.mxu0 %v325
        %378 = vmatprep.subr.mxu0 0.0
        %379 = vmatpush2.msra.mxu0 %v324
        %380 = vmatprep.subr.mxu0 0.0
        %381 = vmatpush2.msra.mxu0 %v323
        %382 = vmatprep.subr.mxu0 0.0
        %383 = vmatpush2.msra.mxu0 %v322
        %384 = vmatprep.subr.mxu0 0.0
        %385 = vmatpush2.msra.mxu0 %v321
        %386 = vmatprep.subr.mxu0 0.0
        %387 = vmatpush2.msra.mxu0 %v320
        %388 = vmatprep.subr.mxu0 0.0
        %389 = vmatpush2.msra.mxu0 %v319
        %390 = vmatprep.subr.mxu0 0.0
        %391 = vmatpush2.msra.mxu0 %v318
        %392 = vmatprep.subr.mxu0 0.0
        %393 = vmatpush2.msra.mxu0 %v317
        %394 = vmatprep.subr.mxu0 0.0
        %395 = vmatpush2.msra.mxu0 %v316
        %396 = vmatprep.subr.mxu0 0.0
        %397 = vmatpush2.msra.mxu0 %v315
        %398 = vmatprep.subr.mxu0 0.0
        %399 = vmatpush2.msra.mxu0 %v314
        %400 = vmatprep.subr.mxu0 0.0
        %401 = vmatpush2.msra.mxu0 %v313
        %402 = vmatprep.subr.mxu0 0.0
        %403 = vmatpush2.msra.mxu0 %v312
        %404 = vmatprep.mubr.f32.mxu0 %v337
        %405 = vmatmul.mubr.f32.gmra.mxu0 %v333
        %v406 = vpop.f32.mrf.mxu0
        %v407 = vadd.f32 %v328, %v406
        %v408 = vpop.f32.mrf.mxu0
        %409 = vdwg.mxu0
        %v410 = vtanh.pop %v407
        %v411 = vld [vmem:[%s3] sm:$0xff]
        %v412 = vld [vmem:[%s3 + $0x8] sm:$0xff]
        %v413 = vld [vmem:[%s3 + $0x10] sm:$0xff]
        %v414 = vld [vmem:[%s3 + $0x18] sm:$0xff]
        %v415 = vld [vmem:[%s3 + $0x20] sm:$0xff]
        %v416 = vld [vmem:[%s3 + $0x28] sm:$0xff]
        %v417 = vld [vmem:[%s3 + $0x30] sm:$0xff]
        %v418 = vld [vmem:[%s3 + $0x38] sm:$0xff]
        %v419 = vld [vmem:[%s3 + $0x40] sm:$0xff]
        %v420 = vld [vmem:[%s3 + $0x48] sm:$0xff]
        %v421 = vld [vmem:[%s3 + $0x50] sm:$0xff]
        %v422 = vld [vmem:[%s3 + $0x58] sm:$0xff]
        %v423 = vld [vmem:[%s3 + $0x60] sm:$0xff]
        %v424 = vld [vmem:[%s3 + $0x68] sm:$0xff]
        %v425 = vld [vmem:[%s3 + $0x70] sm:$0xff]
        %v426 = vld [vmem:[%s3 + $0x78] sm:$0xff]
        %427 = vmatprep.subr.mxu0 0.0
        %428 = vmatpush1.msra.mxu0 %v426
        %429 = vmatprep.subr.mxu0 0.0
        %430 = vmatpush1.msra.mxu0 %v425
        %431 = vmatprep.subr.mxu0 0.0
        %432 = vmatpush1.msra.mxu0 %v424
        %433 = vmatprep.subr.mxu0 0.0
        %434 = vmatpush1.msra.mxu0 %v423
        %435 = vmatprep.subr.mxu0 0.0
        %436 = vmatpush1.msra.mxu0 %v422
        %437 = vmatprep.subr.mxu0 0.0
        %438 = vmatpush1.msra.mxu0 %v421
        %439 = vmatprep.subr.mxu0 0.0
        %440 = vmatpush1.msra.mxu0 %v420
        %441 = vmatprep.subr.mxu0 0.0
        %442 = vmatpush1.msra.mxu0 %v419
        %443 = vmatprep.subr.mxu0 0.0
        %444 = vmatpush1.msra.mxu0 %v418
        %445 = vmatprep.subr.mxu0 0.0
        %446 = vmatpush1.msra.mxu0 %v417
        %447 = vmatprep.subr.mxu0 0.0
        %448 = vmatpush1.msra.mxu0 %v416
        %449 = vmatprep.subr.mxu0 0.0
        %450 = vmatpush1.msra.mxu0 %v415
        %451 = vmatprep.subr.mxu0 0.0
        %452 = vmatpush1.msra.mxu0 %v414
        %453 = vmatprep.subr.mxu0 0.0
        %454 = vmatpush1.msra.mxu0 %v413
        %455 = vmatprep.subr.mxu0 0.0
        %456 = vmatpush1.msra.mxu0 %v412
        %457 = vmatprep.subr.mxu0 0.0
        %458 = vmatpush1.msra.mxu0 %v411
        %459 = vmatprep.subr.mxu0 0.0
        %460 = vmatpush2.msra.mxu0 0.0
        %461 = vmatprep.subr.mxu0 0.0
        %462 = vmatpush2.msra.mxu0 0.0
        %463 = vmatprep.subr.mxu0 0.0
        %464 = vmatpush2.msra.mxu0 0.0
        %465 = vmatprep.subr.mxu0 0.0
        %466 = vmatpush2.msra.mxu0 0.0
        %467 = vmatprep.subr.mxu0 0.0
        %468 = vmatpush2.msra.mxu0 0.0
        %469 = vmatprep.subr.mxu0 0.0
        %470 = vmatpush2.msra.mxu0 0.0
        %471 = vmatprep.subr.mxu0 0.0
        %472 = vmatpush2.msra.mxu0 0.0
        %473 = vmatprep.subr.mxu0 0.0
        %474 = vmatpush2.msra.mxu0 0.0
        %475 = vmatprep.subr.mxu0 0.0
        %476 = vmatpush2.msra.mxu0 0.0
        %477 = vmatprep.subr.mxu0 0.0
        %478 = vmatpush2.msra.mxu0 0.0
        %479 = vmatprep.subr.mxu0 0.0
        %480 = vmatpush2.msra.mxu0 0.0
        %481 = vmatprep.subr.mxu0 0.0
        %482 = vmatpush2.msra.mxu0 0.0
        %483 = vmatprep.subr.mxu0 0.0
        %484 = vmatpush2.msra.mxu0 0.0
        %485 = vmatprep.subr.mxu0 0.0
        %486 = vmatpush2.msra.mxu0 0.0
        %487 = vmatprep.subr.mxu0 0.0
        %488 = vmatpush2.msra.mxu0 0.0
        %489 = vmatprep.subr.mxu0 0.0
        %490 = vmatpush2.msra.mxu0 0.0
        %491 = vmatprep.mubr.f32.mxu0 0.0
        %492 = vmatmul.mubr.f32.gmra.mxu0 %v410
        %v493 = vpop.f32.mrf.mxu0
        %v494 = vadd.f32 0.0, %v493
        %v495 = vpop.f32.mrf.mxu0
        %496 = vdwg.mxu0
        %v497 = vld [vmem:[#allocation2] sm:$0x1]
        %vm498 = vcmask 57344
        %v499 = vsel %vm498, %v494, -inf
        %500 = vmax.xlane.f32.xlu0 %v499
        %v501 = vpop.xlane.xlu0 %500
        %v502 = vmax.f32 %v497, %v501
        %v503 = vsub.f32 %v497, %v502
        %v504 = vmul.f32 %v503, 1.442695
        %v505 = vpow.pop %v504
        %507 = vset.pattern.permute.xlu0 0
        %508 = vperm.xlu0 %507, %v502
        %v509 = vpop.permute.xlu0 %508
        %v511 = vlaneseq
        %v512 = vshrl.u32 %v511, 7
        %v513 = vsub.s32 0, %v512
        %v514 = vrot.slane %v509, %v513
        %v515 = vsub.f32 %v494, %v514
        %v516 = vmul.f32 %v515, 1.442695
        %v517 = vpow.pop %v516
        %v518 = vld [vmem:[#allocation3] sm:$0x1]
        %v519 = vmul.f32 %v505, %v518
        %v520 = vsel %vm498, %v517, 0.0
        %521 = vadd.xlane.f32.xlu0 %v520
        %v522 = vpop.xlane.xlu0 %521
        %v523 = vadd.f32 %v522, 0.0
        %v524 = vadd.f32 %v519, %v523
        %vm525 = vcmask 0
        %526 = vst.msk [vmem:[#allocation3] sm:$0x1] %vm525, %v524
        %527 = vxpose.xlu0.b32.start [1/16] %v517, 128
        %528 = vxpose.xlu0.b32.cont [2/16] 0.0, 128
        %529 = vxpose.xlu0.b32.cont [3/16] 0.0, 128
        %530 = vxpose.xlu0.b32.cont [4/16] 0.0, 128
        %531 = vxpose.xlu0.b32.cont [5/16] 0.0, 128
        %532 = vxpose.xlu0.b32.cont [6/16] 0.0, 128
        %533 = vxpose.xlu0.b32.cont [7/16] 0.0, 128
        %534 = vxpose.xlu0.b32.cont [8/16] 0.0, 128
        %535 = vxpose.xlu0.b32.cont [9/16] 0.0, 128
        %536 = vxpose.xlu0.b32.cont [10/16] 0.0, 128
        %537 = vxpose.xlu0.b32.cont [11/16] 0.0, 128
        %538 = vxpose.xlu0.b32.cont [12/16] 0.0, 128
        %539 = vxpose.xlu0.b32.cont [13/16] 0.0, 128
        %540 = vxpose.xlu0.b32.cont [14/16] 0.0, 128
        %541 = vxpose.xlu0.b32.cont [15/16] 0.0, 128
        %542 = vxpose.xlu0.b32.end [16/16] 0.0, 128
        %v543 = vpop.trf.xlu0
        %v544 = vpop.trf.xlu0
        %v545 = vpop.trf.xlu0
        %v546 = vpop.trf.xlu0
        %v547 = vpop.trf.xlu0
        %v548 = vpop.trf.xlu0
        %v549 = vpop.trf.xlu0
        %v550 = vpop.trf.xlu0
        %v551 = vpop.trf.xlu0
        %v552 = vpop.trf.xlu0
        %v553 = vpop.trf.xlu0
        %v554 = vpop.trf.xlu0
        %v555 = vpop.trf.xlu0
        %v556 = vpop.trf.xlu0
        %v557 = vpop.trf.xlu0
        %v558 = vpop.trf.xlu0
        %vm559 = vcmask 7168
        %v561 = vsel %vm559, %v543, 0
        %vm563 = vcmask 1040384
        %v564 = vsel %vm563, %v333, 0
        %v566 = vsel %vm563, %v337, 0
        %568 = vmatprep.subr.mxu0 0.0
        %569 = vmatpush1.msra.mxu0 0.0
        %570 = vmatprep.subr.mxu0 0.0
        %571 = vmatpush1.msra.mxu0 0.0
        %572 = vmatprep.subr.mxu0 0.0
        %573 = vmatpush1.msra.mxu0 0.0
        %574 = vmatprep.subr.mxu0 0.0
        %575 = vmatpush1.msra.mxu0 0.0
        %576 = vmatprep.subr.mxu0 0.0
        %577 = vmatpush1.msra.mxu0 0.0
        %578 = vmatprep.subr.mxu0 0.0
        %579 = vmatpush1.msra.mxu0 0.0
        %580 = vmatprep.subr.mxu0 0.0
        %581 = vmatpush1.msra.mxu0 0.0
        %582 = vmatprep.subr.mxu0 0.0
        %583 = vmatpush1.msra.mxu0 0.0
        %584 = vmatprep.subr.mxu0 0.0
        %585 = vmatpush1.msra.mxu0 0.0
        %586 = vmatprep.subr.mxu0 0.0
        %587 = vmatpush1.msra.mxu0 0.0
        %588 = vmatprep.subr.mxu0 0.0
        %589 = vmatpush1.msra.mxu0 0.0
        %590 = vmatprep.subr.mxu0 0.0
        %591 = vmatpush1.msra.mxu0 0.0
        %592 = vmatprep.subr.mxu0 0.0
        %593 = vmatpush1.msra.mxu0 0.0
        %594 = vmatprep.subr.mxu0 0.0
        %595 = vmatpush1.msra.mxu0 0.0
        %596 = vmatprep.subr.mxu0 0.0
        %597 = vmatpush1.msra.mxu0 0.0
        %598 = vmatprep.subr.mxu0 %v566
        %599 = vmatpush1.msra.mxu0 %v564
        %600 = vmatprep.subr.mxu0 0.0
        %601 = vmatpush2.msra.mxu0 0.0
        %602 = vmatprep.subr.mxu0 0.0
        %603 = vmatpush2.msra.mxu0 0.0
        %604 = vmatprep.subr.mxu0 0.0
        %605 = vmatpush2.msra.mxu0 0.0
        %606 = vmatprep.subr.mxu0 0.0
        %607 = vmatpush2.msra.mxu0 0.0
        %608 = vmatprep.subr.mxu0 0.0
        %609 = vmatpush2.msra.mxu0 0.0
        %610 = vmatprep.subr.mxu0 0.0
        %611 = vmatpush2.msra.mxu0 0.0
        %612 = vmatprep.subr.mxu0 0.0
        %613 = vmatpush2.msra.mxu0 0.0
        %614 = vmatprep.subr.mxu0 0.0
        %615 = vmatpush2.msra.mxu0 0.0
        %616 = vmatprep.subr.mxu0 0.0
        %617 = vmatpush2.msra.mxu0 0.0
        %618 = vmatprep.subr.mxu0 0.0
        %619 = vmatpush2.msra.mxu0 0.0
        %620 = vmatprep.subr.mxu0 0.0
        %621 = vmatpush2.msra.mxu0 0.0
        %622 = vmatprep.subr.mxu0 0.0
        %623 = vmatpush2.msra.mxu0 0.0
        %624 = vmatprep.subr.mxu0 0.0
        %625 = vmatpush2.msra.mxu0 0.0
        %626 = vmatprep.subr.mxu0 0.0
        %627 = vmatpush2.msra.mxu0 0.0
        %628 = vmatprep.subr.mxu0 0.0
        %629 = vmatpush2.msra.mxu0 0.0
        %630 = vmatprep.subr.mxu0 0.0
        %631 = vmatpush2.msra.mxu0 0.0
        %632 = vmatprep.mubr.f32.mxu0 0.0
        %633 = vmatmul.mubr.f32.gmra.mxu0 %v561
        %v634 = vpop.f32.mrf.mxu0
        %v635 = vadd.f32 0.0, %v634
        %v636 = vpop.f32.mrf.mxu0
        %v637 = vadd.f32 0.0, %v636
        %638 = vdwg.mxu0
        %v639 = vld [vmem:[#allocation4] sm:$0xff]
        %v640 = vld [vmem:[#allocation4 + $0x8] sm:$0xff]
        %v642 = vlaneseq
        %v643 = vshrl.u32 %v642, 7
        %v644 = vsub.s32 0, %v643
        %v645 = vrot.slane %v505, %v644
        %646 = vset.pattern.permute.xlu0 0
        %647 = vperm.xlu0 %646, %v645
        %v648 = vpop.permute.xlu0 %647
        %v650 = vmul.f32 %v648, %v639
        %v651 = vmul.f32 %v648, %v640
        %v652 = vadd.f32 %v650, %v635
        %v653 = vadd.f32 %v651, %v637
        %654 = vst [vmem:[#allocation4] sm:$0xff] %v652
        %655 = vst [vmem:[#allocation4 + $0x8] sm:$0xff] %v653
        %656 = vst.msk [vmem:[#allocation2] sm:$0x1] %vm525, %v502
        // Predicated region
        $region49: #{tpu_custom_call.1} parent=43 // pred_check
          %p657 = pneg %p286
        $region50: #{tpu_custom_call.1} parent=43 // pred_check_branch
          %659 = sbr.rel (%p657) target = $region52
        $region51: #{tpu_custom_call.1} parent=43 // pred_region
          %v660 = vld [vmem:[#allocation4] sm:$0xff]
          %v661 = vld [vmem:[#allocation4 + $0x8] sm:$0xff]
          %v662 = vld [vmem:[%s4] sm:$0xff]
          %v663 = vld [vmem:[%s4 + $0x8] sm:$0xff]
          %v664 = vmul.f32 %v660, %v662
          %v665 = vmul.f32 %v661, %v663
          %v666 = vrot.slane %v664, 4
          %v667 = vadd.f32 %v664, %v666
          %v668 = vrot.slane %v667, 2
          %v669 = vadd.f32 %v667, %v668
          %v670 = vrot.slane %v669, 1
          %v671 = vadd.f32 %v669, %v670
          %v672 = vrot.slane %v665, 4
          %v673 = vadd.f32 %v665, %v672
          %v674 = vrot.slane %v673, 2
          %v675 = vadd.f32 %v673, %v674
          %v676 = vrot.slane %v675, 1
          %v677 = vadd.f32 %v675, %v676
          %v678 = vld [vmem:[%s5] sm:$0xff]
          %v679 = vld [vmem:[%s5 + $0x8] sm:$0xff]
          %v680 = vld [vmem:[%s5 + $0x10] sm:$0xff]
          %v681 = vld [vmem:[%s5 + $0x18] sm:$0xff]
          %v682 = vld [vmem:[%s5 + $0x20] sm:$0xff]
          %v683 = vld [vmem:[%s5 + $0x28] sm:$0xff]
          %v684 = vld [vmem:[%s5 + $0x30] sm:$0xff]
          %v685 = vld [vmem:[%s5 + $0x38] sm:$0xff]
          %v686 = vld [vmem:[%s5 + $0x40] sm:$0xff]
          %v687 = vld [vmem:[%s5 + $0x48] sm:$0xff]
          %v688 = vld [vmem:[%s5 + $0x50] sm:$0xff]
          %v689 = vld [vmem:[%s5 + $0x58] sm:$0xff]
          %v690 = vld [vmem:[%s5 + $0x60] sm:$0xff]
          %v691 = vld [vmem:[%s5 + $0x68] sm:$0xff]
          %v692 = vld [vmem:[%s5 + $0x70] sm:$0xff]
          %v693 = vld [vmem:[%s5 + $0x78] sm:$0xff]
          %v694 = vld [vmem:[%s5 + $0x80] sm:$0xff]
          %v695 = vld [vmem:[%s5 + $0x88] sm:$0xff]
          %v696 = vld [vmem:[%s5 + $0x90] sm:$0xff]
          %v697 = vld [vmem:[%s5 + $0x98] sm:$0xff]
          %v698 = vld [vmem:[%s5 + $0xa0] sm:$0xff]
          %v699 = vld [vmem:[%s5 + $0xa8] sm:$0xff]
          %v700 = vld [vmem:[%s5 + $0xb0] sm:$0xff]
          %v701 = vld [vmem:[%s5 + $0xb8] sm:$0xff]
          %v702 = vld [vmem:[%s5 + $0xc0] sm:$0xff]
          %v703 = vld [vmem:[%s5 + $0xc8] sm:$0xff]
          %v704 = vld [vmem:[%s5 + $0xd0] sm:$0xff]
          %v705 = vld [vmem:[%s5 + $0xd8] sm:$0xff]
          %v706 = vld [vmem:[%s5 + $0xe0] sm:$0xff]
          %v707 = vld [vmem:[%s5 + $0xe8] sm:$0xff]
          %v708 = vld [vmem:[%s5 + $0xf0] sm:$0xff]
          %v709 = vld [vmem:[%s5 + $0xf8] sm:$0xff]
          %710 = vmatprep.subr.mxu0 0.0
          %711 = vmatpush1.msra.mxu0 %v693
          %712 = vmatprep.subr.mxu0 0.0
          %713 = vmatpush1.msra.mxu0 %v692
          %714 = vmatprep.subr.mxu0 0.0
          %715 = vmatpush1.msra.mxu0 %v691
          %716 = vmatprep.subr.mxu0 0.0
          %717 = vmatpush1.msra.mxu0 %v690
          %718 = vmatprep.subr.mxu0 0.0
          %719 = vmatpush1.msra.mxu0 %v689
          %720 = vmatprep.subr.mxu0 0.0
          %721 = vmatpush1.msra.mxu0 %v688
          %722 = vmatprep.subr.mxu0 0.0
          %723 = vmatpush1.msra.mxu0 %v687
          %724 = vmatprep.subr.mxu0 0.0
          %725 = vmatpush1.msra.mxu0 %v686
          %726 = vmatprep.subr.mxu0 0.0
          %727 = vmatpush1.msra.mxu0 %v685
          %728 = vmatprep.subr.mxu0 0.0
          %729 = vmatpush1.msra.mxu0 %v684
          %730 = vmatprep.subr.mxu0 0.0
          %731 = vmatpush1.msra.mxu0 %v683
          %732 = vmatprep.subr.mxu0 0.0
          %733 = vmatpush1.msra.mxu0 %v682
          %734 = vmatprep.subr.mxu0 0.0
          %735 = vmatpush1.msra.mxu0 %v681
          %736 = vmatprep.subr.mxu0 0.0
          %737 = vmatpush1.msra.mxu0 %v680
          %738 = vmatprep.subr.mxu0 0.0
          %739 = vmatpush1.msra.mxu0 %v679
          %740 = vmatprep.subr.mxu0 0.0
          %741 = vmatpush1.msra.mxu0 %v678
          %742 = vmatprep.subr.mxu0 0.0
          %743 = vmatpush2.msra.mxu0 %v709
          %744 = vmatprep.subr.mxu0 0.0
          %745 = vmatpush2.msra.mxu0 %v708
          %746 = vmatprep.subr.mxu0 0.0
          %747 = vmatpush2.msra.mxu0 %v707
          %748 = vmatprep.subr.mxu0 0.0
          %749 = vmatpush2.msra.mxu0 %v706
          %750 = vmatprep.subr.mxu0 0.0
          %751 = vmatpush2.msra.mxu0 %v705
          %752 = vmatprep.subr.mxu0 0.0
          %753 = vmatpush2.msra.mxu0 %v704
          %754 = vmatprep.subr.mxu0 0.0
          %755 = vmatpush2.msra.mxu0 %v703
          %756 = vmatprep.subr.mxu0 0.0
          %757 = vmatpush2.msra.mxu0 %v702
          %758 = vmatprep.subr.mxu0 0.0
          %759 = vmatpush2.msra.mxu0 %v701
          %760 = vmatprep.subr.mxu0 0.0
          %761 = vmatpush2.msra.mxu0 %v700
          %762 = vmatprep.subr.mxu0 0.0
          %763 = vmatpush2.msra.mxu0 %v699
          %764 = vmatprep.subr.mxu0 0.0
          %765 = vmatpush2.msra.mxu0 %v698
          %766 = vmatprep.subr.mxu0 0.0
          %767 = vmatpush2.msra.mxu0 %v697
          %768 = vmatprep.subr.mxu0 0.0
          %769 = vmatpush2.msra.mxu0 %v696
          %770 = vmatprep.subr.mxu0 0.0
          %771 = vmatpush2.msra.mxu0 %v695
          %772 = vmatprep.subr.mxu0 0.0
          %773 = vmatpush2.msra.mxu0 %v694
          %774 = vmatprep.mubr.f32.mxu0 %v677
          %775 = vmatmul.mubr.f32.gmra.mxu0 %v671
          %v776 = vpop.f32.mrf.mxu0
          %v777 = vadd.f32 0.0, %v776
          %v778 = vpop.f32.mrf.mxu0
          %779 = vdwg.mxu0
          %v780 = vld [vmem:[#allocation3] sm:$0x1]
          %782 = vset.pattern.permute.xlu0 0
          %783 = vperm.xlu0 %782, %v780
          %v784 = vpop.permute.xlu0 %783
          %v786 = vlaneseq
          %v787 = vshrl.u32 %v786, 7
          %v788 = vsub.s32 0, %v787
          %v789 = vrot.slane %v784, %v788
          %v790 = vrcp.pop %v789
          %v791 = vmul.f32 %v777, %v790
          %vm792 = vcmask 253952
          %793 = vst.msk [vmem:[%s274] sm:$0x1] %vm792, %v791
        $region52: #{tpu_custom_call.1} parent=43 // pred_fallthru
          _
        %s794 = sand.u32 %s178, 1
        %s795 = scalar_lea.sflag [#allocation6], %s794
        %s796 = sand.u32 %s178, 1
        %s797 = scalar_lea.vmem [#allocation5], %s796
        // Predicated region
        $region53: #{tpu_custom_call.1} parent=43 // pred_check
          %p798 = pneg %p188
        $region54: #{tpu_custom_call.1} parent=43 // pred_check_branch
          %800 = sbr.rel (%p798) target = $region56
        $region55: #{tpu_custom_call.1} parent=43 // pred_region
          %s802 = ssub.s32 16, 16
          %803 = vsyncadd %s795, %s802
          %s804 = smul.addr %s24, 16
          %s805 = scalar_lea.hbm %s6, %s804
          %s807 = sshll.u32 %s797, 4
          %s808 = int_to_ptr.vmem [resolvable:$true] %s807
          %810 = dma.vmem_to_hbm [thread:$0]  %s808, 16, %s805, %s795
        $region56: #{tpu_custom_call.1} parent=43 // pred_fallthru
          _
      $region44: #{tpu_custom_call.1} parent=5 // pred_fallthru
        _
      %p811 = scmp.le.s32.totalorder 2, %s15
      // Predicated region
      $region57: #{tpu_custom_call.1} parent=5 // pred_check
        %p812 = pneg %p811
      $region58: #{tpu_custom_call.1} parent=5 // pred_check_branch
        %814 = sbr.rel (%p812) target = $region60
      $region59: #{tpu_custom_call.1} parent=5 // pred_region
        %s815 = ssub.s32 %s15, 2
        // Predicated region
        $region61: #{tpu_custom_call.1} parent=59 // pred_check
          %p816 = pneg %p194
        $region62: #{tpu_custom_call.1} parent=59 // pred_check_branch
          %818 = sbr.rel (%p816) target = $region64
        $region63: #{tpu_custom_call.1} parent=59 // pred_region
          %s819 = sand.u32 %s179, 1
          %s820 = scalar_lea.sflag [#allocation6], %s819
          %s821 = sand.u32 %s179, 1
          %s822 = scalar_lea.vmem [#allocation5], %s821
          %823 = dma.done %s820, 16
        $region64: #{tpu_custom_call.1} parent=59 // pred_fallthru
          _
      $region60: #{tpu_custom_call.1} parent=5 // pred_fallthru
        _
    $region6: #{tpu_custom_call.1} parent=1 // loop_footer
      %s19 = sadd.s32 1, %s15
    $region7: #{tpu_custom_call.1} parent=1 // loop_footer_branch
      %14 = sbr.rel target = $region3
    $region8: #{tpu_custom_call.1} parent=1 // loop_exit
      _
    %824 = vsyncpa [#allocation6], 1
    %s825 = scalar_lea.sflag [#allocation6], 1
    %826 = vsyncpa %s825, 1

</llo_original>
